<compile_context>
chip_gen: v5e
topology: v5e:2x2
jax: 0.10.0
libtpu: 0.0.40
codegen_flags: <defaults>
</compile_context>

<pallas_src>
import jax
import jax.numpy as jnp
from jax.experimental import pallas as pl
from jax.experimental.pallas import tpu as pltpu

IN_FEATURES = 28 * 28     # 784 — kept unpadded in HBM; Mosaic pads lanes in VMEM only
HIDDEN = 128
NUM_CLASSES = 10
C_PAD = 128               # lane-dense padded class dim (unmasked full-lane stores)
MAX_TB = 1024             # batch tile: f32 x tile = 1024*784*4B ~ 3.1 MiB per buffer


def _round_up(n, m):
    return (n + m - 1) // m * m


def mlp_logsoftmax_kernel(x_ref, w1_ref, b1_ref, w2_ref, b2_ref, o_ref):
    # x_ref : (TB, 784)  f32   (cast to bf16 in-kernel; avoids a padded bf16 HBM copy)
    # w1_ref: (784, 128) bf16, b1_ref: (1, 128) f32
    # w2_ref: (128, 128) bf16, b2_ref: (1, 128) f32
    # o_ref : (TB, 128)  f32
    x_bf = x_ref[...].astype(jnp.bfloat16)

    # layer_1 + ReLU (bf16 MXU matmul, f32 accumulate; elementwise stays f32)
    h = jnp.dot(x_bf, w1_ref[...], preferred_element_type=jnp.float32) + b1_ref[...]
    h = jnp.maximum(h, 0.0)

    # layer_2 — bf16 single-pass MXU matmul (f32 accumulate)
    logits = jnp.dot(h.astype(jnp.bfloat16), w2_ref[...],
                     preferred_element_type=jnp.float32) + b2_ref[...]

    # log_softmax over the 10 real classes: padded lanes masked to -inf so they
    # contribute exp(-inf)=0 and never poison the row max / row sum.
    col = jax.lax.broadcasted_iota(jnp.int32, logits.shape, 1)
    masked = jnp.where(col < NUM_CLASSES, logits, -jnp.inf)
    m = jnp.max(masked, axis=1, keepdims=True)
    shifted = masked - m
    lse = jnp.log(jnp.sum(jnp.exp(shifted), axis=1, keepdims=True))
    o_ref[...] = (shifted - lse).astype(o_ref.dtype)


def prepare_params(w1, b1, w2, b2):
    """One-time parameter prep, hoisted off the forward path: bf16 weights,
    lane-padded layer-2 weight/bias, row-shaped biases."""
    w1_bf = w1.astype(jnp.bfloat16)                        # (784, 128) bf16
    b1_row = b1.reshape(1, HIDDEN).astype(jnp.float32)     # (1, 128)   f32
    w2_p = jnp.zeros((HIDDEN, C_PAD), jnp.bfloat16)
    w2_p = w2_p.at[:, :NUM_CLASSES].set(w2.astype(jnp.bfloat16))
    b2_row = jnp.zeros((1, C_PAD), jnp.float32)
    b2_row = b2_row.at[0, :NUM_CLASSES].set(b2.astype(jnp.float32))
    return w1_bf, b1_row, w2_p, b2_row


def mnist_classifier_forward(x_nchw, w1_bf, b1_row, w2_p, b2_row):
    B = x_nchw.shape[0]
    # glue: flatten NCHW -> (B, C*H*W), exactly x.view(x.size(0), -1)
    x2d = x_nchw.reshape(B, -1).astype(jnp.float32)
    assert x2d.shape[1] == IN_FEATURES

    # Batch tile: multiple of 16 rows (bf16 sublane packing); for large B this
    # yields >=2 grid steps so the "parallel" axis shards across v7x's two TCs.
    TB = min(MAX_TB, _round_up(pl.cdiv(B, 2), 16))
    B_pad = _round_up(B, TB)
    if B_pad != B:   # only copy when the batch actually needs padding
        x2d = jnp.pad(x2d, ((0, B_pad - B), (0, 0)))

    grid = (B_pad // TB,)
    flops = 2 * B_pad * (IN_FEATURES * HIDDEN + HIDDEN * C_PAD)
    bytes_accessed = (B_pad * IN_FEATURES * 4
                      + w1_bf.size * 2 + w2_p.size * 2
                      + (b1_row.size + b2_row.size) * 4
                      + B_pad * C_PAD * 4)

    out = pl.pallas_call(
        mlp_logsoftmax_kernel,
        out_shape=jax.ShapeDtypeStruct((B_pad, C_PAD), jnp.float32),
        grid_spec=pltpu.PrefetchScalarGridSpec(
            num_scalar_prefetch=0,
            grid=grid,
            in_specs=[
                # x tiled over batch; last dim = full 784 extent (legal: equals array dim)
                pl.BlockSpec((TB, IN_FEATURES), lambda i: (i, 0)),
                # weights / biases stay VMEM-resident across grid steps
                pl.BlockSpec((IN_FEATURES, HIDDEN), lambda i: (0, 0)),
                pl.BlockSpec((1, HIDDEN), lambda i: (0, 0)),
                pl.BlockSpec((HIDDEN, C_PAD), lambda i: (0, 0)),
                pl.BlockSpec((1, C_PAD), lambda i: (0, 0)),
            ],
            out_specs=pl.BlockSpec((TB, C_PAD), lambda i: (i, 0)),
        ),
        compiler_params=pltpu.CompilerParams(
            dimension_semantics=("parallel",)),   # batch axis: shards across v7x's 2 TCs
        cost_estimate=pl.CostEstimate(
            flops=flops,
            transcendentals=B_pad * (C_PAD + 1),
            bytes_accessed=bytes_accessed),
    )(x2d, w1_bf, b1_row, w2_p, b2_row)

    # drop batch padding and the 118 padded class lanes
    return out[:B, :NUM_CLASSES]


def init_params(key):
    """Deterministic init mirroring nn.Linear default (U[-1/sqrt(fan_in), +1/sqrt(fan_in)])."""
    k1, k2, k3, k4 = jax.random.split(key, 4)
    bound1 = 1.0 / jnp.sqrt(IN_FEATURES)
    bound2 = 1.0 / jnp.sqrt(HIDDEN)
    w1 = jax.random.uniform(k1, (IN_FEATURES, HIDDEN), jnp.float32, -bound1, bound1)
    b1 = jax.random.uniform(k2, (HIDDEN,), jnp.float32, -bound1, bound1)
    w2 = jax.random.uniform(k3, (HIDDEN, NUM_CLASSES), jnp.float32, -bound2, bound2)
    b2 = jax.random.uniform(k4, (NUM_CLASSES,), jnp.float32, -bound2, bound2)
    return w1, b1, w2, b2


if __name__ == "__main__":
    key = jax.random.PRNGKey(0)
    kx, kp = jax.random.split(key)

    B = 2
    x = jax.random.normal(kx, (B, 1, 28, 28), jnp.float32)  # NCHW, like PyTorch
    w1, b1, w2, b2 = init_params(kp)

    # one-time parameter prep (hoisted out of the per-step forward path)
    params = prepare_params(w1, b1, w2, b2)

    fwd = jax.jit(mnist_classifier_forward)
    out = jax.block_until_ready(fwd(x, *params))

    # pure-JAX reference using the same bf16 quantization as the MXU path
    # (x/w1 bf16, h bf16, w2 bf16; accumulation and elementwise in f32)
    x2d = x.reshape(B, -1)
    xb = x2d.astype(jnp.bfloat16).astype(jnp.float32)
    w1b = w1.astype(jnp.bfloat16).astype(jnp.float32)
    w2b = w2.astype(jnp.bfloat16).astype(jnp.float32)
    h = jnp.maximum(xb @ w1b + b1, 0.0)
    hb = h.astype(jnp.bfloat16).astype(jnp.float32)
    logits = hb @ w2b + b2
    ref = jax.nn.log_softmax(logits, axis=1)

    assert out.shape == (B, NUM_CLASSES)
    assert bool(jnp.all(jnp.isfinite(out)))
    assert jnp.allclose(out, ref, atol=2e-3, rtol=2e-3)

    print("KERNEL_OK")
</pallas_src>

<mosaic_0001>
module attributes {stable_mosaic.version = 11 : i64} {
  func.func @mlp_logsoftmax_kernel(%arg0: i32, %arg1: memref<16x784xf32, #tpu.memory_space<vmem>>, %arg2: memref<784x128xbf16, #tpu.memory_space<vmem>>, %arg3: memref<1x128xf32, #tpu.memory_space<vmem>>, %arg4: memref<128x128xbf16, #tpu.memory_space<vmem>>, %arg5: memref<1x128xf32, #tpu.memory_space<vmem>>, %arg6: memref<16x128xf32, #tpu.memory_space<vmem>>) attributes {dimension_semantics = [#tpu.dimension_semantics<parallel>], iteration_bounds = array<i64: 1>, scalar_prefetch = 0 : i64, scratch_operands = 0 : i64, tpu.core_type = #tpu.core_type<tc>, window_params = [{transform_indices = @transform_0, window_bounds = array<i64: 16, 784>}, {pipeline_mode = #tpu.pipeline_mode<synchronous>, transform_indices = @transform_1, window_bounds = array<i64: 784, 128>}, {pipeline_mode = #tpu.pipeline_mode<synchronous>, transform_indices = @transform_2, window_bounds = array<i64: 1, 128>}, {pipeline_mode = #tpu.pipeline_mode<synchronous>, transform_indices = @transform_3, window_bounds = array<i64: 128, 128>}, {pipeline_mode = #tpu.pipeline_mode<synchronous>, transform_indices = @transform_4, window_bounds = array<i64: 1, 128>}, {transform_indices = @transform_5, window_bounds = array<i64: 16, 128>}]} {
    %c0 = arith.constant 0 : index
    %c0_0 = arith.constant 0 : index
    %0 = vector.load %arg1[%c0, %c0_0] : memref<16x784xf32, #tpu.memory_space<vmem>>, vector<16x784xf32>
    %1 = arith.truncf %0 : vector<16x784xf32> to vector<16x784xbf16>
    %c0_1 = arith.constant 0 : index
    %c0_2 = arith.constant 0 : index
    %2 = vector.load %arg2[%c0_1, %c0_2] : memref<784x128xbf16, #tpu.memory_space<vmem>>, vector<784x128xbf16>
    %cst = arith.constant dense<0.000000e+00> : vector<16x128xf32>
    %3 = tpu.matmul %1, %2, %cst {dimension_numbers = #tpu.dot_dimension_numbers<[1], [0], [0], [1], [0, 0, 1, 1], [], []>} : vector<16x784xbf16>, vector<784x128xbf16>, vector<16x128xf32> -> vector<16x128xf32>
    %c0_3 = arith.constant 0 : index
    %c0_4 = arith.constant 0 : index
    %4 = vector.load %arg3[%c0_3, %c0_4] : memref<1x128xf32, #tpu.memory_space<vmem>>, vector<1x128xf32>
    %5 = vector.broadcast %4 : vector<1x128xf32> to vector<16x128xf32>
    %6 = arith.addf %3, %5 : vector<16x128xf32>
    %cst_5 = arith.constant 0.000000e+00 : f32
    %7 = vector.broadcast %cst_5 : f32 to vector<16x128xf32>
    %8 = arith.maximumf %6, %7 : vector<16x128xf32>
    %9 = arith.truncf %8 : vector<16x128xf32> to vector<16x128xbf16>
    %c0_6 = arith.constant 0 : index
    %c0_7 = arith.constant 0 : index
    %10 = vector.load %arg4[%c0_6, %c0_7] : memref<128x128xbf16, #tpu.memory_space<vmem>>, vector<128x128xbf16>
    %cst_8 = arith.constant dense<0.000000e+00> : vector<16x128xf32>
    %11 = tpu.matmul %9, %10, %cst_8 {dimension_numbers = #tpu.dot_dimension_numbers<[1], [0], [0], [1], [0, 0, 1, 1], [], []>} : vector<16x128xbf16>, vector<128x128xbf16>, vector<16x128xf32> -> vector<16x128xf32>
    %c0_9 = arith.constant 0 : index
    %c0_10 = arith.constant 0 : index
    %12 = vector.load %arg5[%c0_9, %c0_10] : memref<1x128xf32, #tpu.memory_space<vmem>>, vector<1x128xf32>
    %13 = vector.broadcast %12 : vector<1x128xf32> to vector<16x128xf32>
    %14 = arith.addf %11, %13 : vector<16x128xf32>
    %15 = tpu.iota {dimensions = array<i32: 1>} : vector<16x128xi32>
    %c10_i32 = arith.constant 10 : i32
    %16 = vector.broadcast %c10_i32 : i32 to vector<16x128xi32>
    %17 = arith.cmpi slt, %15, %16 : vector<16x128xi32>
    %cst_11 = arith.constant 0xFF800000 : f32
    %18 = vector.broadcast %cst_11 : f32 to vector<16x128xf32>
    %19 = arith.select %17, %14, %18 : vector<16x128xi1>, vector<16x128xf32>
    %cst_12 = arith.constant dense<0xFF800000> : vector<16xf32>
    %20 = vector.multi_reduction <maximumf>, %19, %cst_12 [1] : vector<16x128xf32> to vector<16xf32>
    %21 = vector.shape_cast %20 : vector<16xf32> to vector<16x1xf32>
    %22 = vector.broadcast %21 : vector<16x1xf32> to vector<16x128xf32>
    %23 = arith.subf %19, %22 : vector<16x128xf32>
    %24 = math.exp %23 : vector<16x128xf32>
    %cst_13 = arith.constant dense<0.000000e+00> : vector<16xf32>
    %25 = vector.multi_reduction <add>, %24, %cst_13 [1] : vector<16x128xf32> to vector<16xf32>
    %26 = vector.shape_cast %25 : vector<16xf32> to vector<16x1xf32>
    %27 = math.log %26 : vector<16x1xf32>
    %28 = vector.broadcast %27 : vector<16x1xf32> to vector<16x128xf32>
    %29 = arith.subf %23, %28 : vector<16x128xf32>
    %c0_14 = arith.constant 0 : index
    %c0_15 = arith.constant 0 : index
    %30 = vector.load %arg6[%c0_14, %c0_15] : memref<16x128xf32, #tpu.memory_space<vmem>>, vector<16x128xf32>
    tpu.vector_store %arg6[%c0_14, %c0_15], %29 {strides = array<i32>} : memref<16x128xf32, #tpu.memory_space<vmem>>, vector<16x128xf32>,
    return
  }
  func.func @transform_0(%arg0: i32) -> (i32, i32) {
    %c0_i32 = arith.constant 0 : i32
    %c0_i32_0 = arith.constant 0 : i32
    return %arg0, %c0_i32 : i32, i32
  }
  func.func @transform_1(%arg0: i32) -> (i32, i32) {
    %c0_i32 = arith.constant 0 : i32
    %c0_i32_0 = arith.constant 0 : i32
    %c0_i32_1 = arith.constant 0 : i32
    return %c0_i32, %c0_i32_0 : i32, i32
  }
  func.func @transform_2(%arg0: i32) -> (i32, i32) {
    %c0_i32 = arith.constant 0 : i32
    %c0_i32_0 = arith.constant 0 : i32
    %c0_i32_1 = arith.constant 0 : i32
    return %c0_i32, %c0_i32_0 : i32, i32
  }
  func.func @transform_3(%arg0: i32) -> (i32, i32) {
    %c0_i32 = arith.constant 0 : i32
    %c0_i32_0 = arith.constant 0 : i32
    %c0_i32_1 = arith.constant 0 : i32
    return %c0_i32, %c0_i32_0 : i32, i32
  }
  func.func @transform_4(%arg0: i32) -> (i32, i32) {
    %c0_i32 = arith.constant 0 : i32
    %c0_i32_0 = arith.constant 0 : i32
    %c0_i32_1 = arith.constant 0 : i32
    return %c0_i32, %c0_i32_0 : i32, i32
  }
  func.func @transform_5(%arg0: i32) -> (i32, i32) {
    %c0_i32 = arith.constant 0 : i32
    %c0_i32_0 = arith.constant 0 : i32
    return %arg0, %c0_i32 : i32, i32
  }
}

</mosaic_0001>

<llo_original>
// kernel: mnist_classifier_forward.1
$region0: #{mnist_classifier_forward.1}
  #allocation0 [shape = 'u32[]', space=smem, size = 0x4, offset = 0x4, fixed_abs, tag = 'smem constant byte address 0x4 - core index']
  #allocation1 [shape = 'u32[72,128]{1,0:T(1,128)}', space=vmem, size = 0x9000, scoped, tag = 'internal scratch']
  %s0 = inlined_call_operand.vmem [shape: f32[16,784], index: 0, kind: input, shape index: {}]
  %s1 = inlined_call_operand.hbm [shape: bf16[784,128], index: 1, kind: input, shape index: {}]
  %s2 = inlined_call_operand.vmem [shape: f32[1,128], index: 2, kind: input, shape index: {}]
  %s3 = inlined_call_operand.vmem [shape: bf16[128,128], index: 3, kind: input, shape index: {}]
  %s4 = inlined_call_operand.vmem [shape: f32[1,128], index: 4, kind: input, shape index: {}]
  %s5 = inlined_call_operand.vmem [shape: f32[16,128], index: 5, kind: output, shape index: {}]
  %s6 = sld [smem:[#allocation0]]
  $region34: #{mnist_classifier_forward.1} parent=0
    _
  %s8 = ssub.s32 1, %s6
  %s9 = scalar_select 0, %s8, %s6
  $region1: #{mnist_classifier_forward.1} parent=0
    #allocation2 [shape = 'u8[200704]{0}', space=vmem, size = 0x31000, scoped, tag = 'input window, operand 1, single buffered']
    #allocation3 [shape = 's32[1]{0}', space=sflag, size = 0x4, scoped, tag = 'scoped memory for mnist_classifier_forward.1']
    %10 = vsyncpa [#allocation3], 0
    // Predicated region
    $region2: #{mnist_classifier_forward.1} parent=1 // pred_check
      _
    $region3: #{mnist_classifier_forward.1} parent=1 // pred_check_branch
      %12 = sbr.rel (0) target = $region5
    $region4: #{mnist_classifier_forward.1} parent=1 // pred_region
      _
    $region5: #{mnist_classifier_forward.1} parent=1 // pred_fallthru
      _
    // Predicated region
    $region6: #{mnist_classifier_forward.1} parent=1 // pred_check
      _
    $region7: #{mnist_classifier_forward.1} parent=1 // pred_check_branch
      %14 = sbr.rel (0) target = $region9
    $region8: #{mnist_classifier_forward.1} parent=1 // pred_region
      %16 = vsyncadd [#allocation3], 0
      %s17 = sshll.u32 %s1, 4
      %s18 = int_to_ptr.hbm [resolvable:$true] %s17
      %s19 = sshll.u32 [#allocation2], 4
      %s20 = int_to_ptr.vmem [resolvable:$true] %s19
      %25 = dma.hbm_to_vmem [thread:$0]  %s18, 6272, %s20, [#allocation3], 64, 64, 4
    $region9: #{mnist_classifier_forward.1} parent=1 // pred_fallthru
      _
    // Predicated region
    $region10: #{mnist_classifier_forward.1} parent=1 // pred_check
      _
    $region11: #{mnist_classifier_forward.1} parent=1 // pred_check_branch
      %27 = sbr.rel (0) target = $region13
    $region12: #{mnist_classifier_forward.1} parent=1 // pred_region
      _
    $region13: #{mnist_classifier_forward.1} parent=1 // pred_fallthru
      _
    // Predicated region
    $region14: #{mnist_classifier_forward.1} parent=1 // pred_check
      _
    $region15: #{mnist_classifier_forward.1} parent=1 // pred_check_branch
      %29 = sbr.rel (0) target = $region17
    $region16: #{mnist_classifier_forward.1} parent=1 // pred_region
      _
    $region17: #{mnist_classifier_forward.1} parent=1 // pred_fallthru
      _
    // Predicated region
    $region18: #{mnist_classifier_forward.1} parent=1 // pred_check
      _
    $region19: #{mnist_classifier_forward.1} parent=1 // pred_check_branch
      %31 = sbr.rel (0) target = $region21
    $region20: #{mnist_classifier_forward.1} parent=1 // pred_region
      _
    $region21: #{mnist_classifier_forward.1} parent=1 // pred_fallthru
      _
    // Predicated region
    $region22: #{mnist_classifier_forward.1} parent=1 // pred_check
      _
    $region23: #{mnist_classifier_forward.1} parent=1 // pred_check_branch
      %33 = sbr.rel (0) target = $region25
    $region24: #{mnist_classifier_forward.1} parent=1 // pred_region
      %35 = dma.done [#allocation3], 6272
    $region25: #{mnist_classifier_forward.1} parent=1 // pred_fallthru
      _
    %v37 = vld [vmem:[%s0] sm:$0xff]
    %v38 = vld [vmem:[%s0 + $0x8] sm:$0xff]
    %v39 = vld [vmem:[%s0 + $0x10] sm:$0xff]
    %v40 = vld [vmem:[%s0 + $0x18] sm:$0xff]
    %v41 = vld [vmem:[%s0 + $0x20] sm:$0xff]
    %v42 = vld [vmem:[%s0 + $0x28] sm:$0xff]
    %v43 = vld [vmem:[%s0 + $0x30] sm:$0xff]
    %v44 = vld [vmem:[%s0 + $0x38] sm:$0xff]
    %v45 = vld [vmem:[%s0 + $0x40] sm:$0xff]
    %v46 = vld [vmem:[%s0 + $0x48] sm:$0xff]
    %v47 = vld [vmem:[%s0 + $0x50] sm:$0xff]
    %v48 = vld [vmem:[%s0 + $0x58] sm:$0xff]
    %v49 = vld [vmem:[%s0 + $0x60] sm:$0xff]
    %v50 = vld [vmem:[%s0 + $0x68] sm:$0xff]
    %v51 = vpack.c.bf16 %v44, %v37
    %v52 = vpack.c.bf16 %v45, %v38
    %v53 = vpack.c.bf16 %v46, %v39
    %v54 = vpack.c.bf16 %v47, %v40
    %v55 = vpack.c.bf16 %v48, %v41
    %v56 = vpack.c.bf16 %v49, %v42
    %v57 = vpack.c.bf16 %v50, %v43
    %v58 = vld [vmem:[#allocation2] sm:$0xf]
    %v59 = vld [vmem:[#allocation2 + $0x4] sm:$0xf]
    %v60 = vld [vmem:[#allocation2 + $0x8] sm:$0xf]
    %v61 = vld [vmem:[#allocation2 + $0xc] sm:$0xf]
    %v62 = vld [vmem:[#allocation2 + $0x10] sm:$0xf]
    %v63 = vld [vmem:[#allocation2 + $0x14] sm:$0xf]
    %v64 = vld [vmem:[#allocation2 + $0x18] sm:$0xf]
    %v65 = vld [vmem:[#allocation2 + $0x1c] sm:$0xf]
    %v66 = vld [vmem:[#allocation2 + $0x20] sm:$0xf]
    %v67 = vld [vmem:[#allocation2 + $0x24] sm:$0xf]
    %v68 = vld [vmem:[#allocation2 + $0x28] sm:$0xf]
    %v69 = vld [vmem:[#allocation2 + $0x2c] sm:$0xf]
    %v70 = vld [vmem:[#allocation2 + $0x30] sm:$0xf]
    %v71 = vld [vmem:[#allocation2 + $0x34] sm:$0xf]
    %v72 = vld [vmem:[#allocation2 + $0x38] sm:$0xf]
    %v73 = vld [vmem:[#allocation2 + $0x3c] sm:$0xf]
    %v74 = vld [vmem:[#allocation2 + $0x40] sm:$0xf]
    %v75 = vld [vmem:[#allocation2 + $0x44] sm:$0xf]
    %v76 = vld [vmem:[#allocation2 + $0x48] sm:$0xf]
    %v77 = vld [vmem:[#allocation2 + $0x4c] sm:$0xf]
    %v78 = vld [vmem:[#allocation2 + $0x50] sm:$0xf]
    %v79 = vld [vmem:[#allocation2 + $0x54] sm:$0xf]
    %v80 = vld [vmem:[#allocation2 + $0x58] sm:$0xf]
    %v81 = vld [vmem:[#allocation2 + $0x5c] sm:$0xf]
    %v82 = vld [vmem:[#allocation2 + $0x60] sm:$0xf]
    %v83 = vld [vmem:[#allocation2 + $0x64] sm:$0xf]
    %v84 = vld [vmem:[#allocation2 + $0x68] sm:$0xf]
    %v85 = vld [vmem:[#allocation2 + $0x6c] sm:$0xf]
    %v86 = vld [vmem:[#allocation2 + $0x70] sm:$0xf]
    %v87 = vld [vmem:[#allocation2 + $0x74] sm:$0xf]
    %v88 = vld [vmem:[#allocation2 + $0x78] sm:$0xf]
    %v89 = vld [vmem:[#allocation2 + $0x7c] sm:$0xf]
    %v90 = vld [vmem:[#allocation2 + $0x80] sm:$0xf]
    %v91 = vld [vmem:[#allocation2 + $0x84] sm:$0xf]
    %v92 = vld [vmem:[#allocation2 + $0x88] sm:$0xf]
    %v93 = vld [vmem:[#allocation2 + $0x8c] sm:$0xf]
    %v94 = vld [vmem:[#allocation2 + $0x90] sm:$0xf]
    %v95 = vld [vmem:[#allocation2 + $0x94] sm:$0xf]
    %v96 = vld [vmem:[#allocation2 + $0x98] sm:$0xf]
    %v97 = vld [vmem:[#allocation2 + $0x9c] sm:$0xf]
    %v98 = vld [vmem:[#allocation2 + $0xa0] sm:$0xf]
    %v99 = vld [vmem:[#allocation2 + $0xa4] sm:$0xf]
    %v100 = vld [vmem:[#allocation2 + $0xa8] sm:$0xf]
    %v101 = vld [vmem:[#allocation2 + $0xac] sm:$0xf]
    %v102 = vld [vmem:[#allocation2 + $0xb0] sm:$0xf]
    %v103 = vld [vmem:[#allocation2 + $0xb4] sm:$0xf]
    %v104 = vld [vmem:[#allocation2 + $0xb8] sm:$0xf]
    %v105 = vld [vmem:[#allocation2 + $0xbc] sm:$0xf]
    %v106 = vld [vmem:[#allocation2 + $0xc0] sm:$0xf]
    %v107 = vld [vmem:[#allocation2 + $0xc4] sm:$0xf]
    %v108 = vld [vmem:[#allocation2 + $0xc8] sm:$0xf]
    %v109 = vld [vmem:[#allocation2 + $0xcc] sm:$0xf]
    %v110 = vld [vmem:[#allocation2 + $0xd0] sm:$0xf]
    %v111 = vld [vmem:[#allocation2 + $0xd4] sm:$0xf]
    %v112 = vld [vmem:[#allocation2 + $0xd8] sm:$0xf]
    %v113 = vld [vmem:[#allocation2 + $0xdc] sm:$0xf]
    %v114 = vld [vmem:[#allocation2 + $0xe0] sm:$0xf]
    %v115 = vld [vmem:[#allocation2 + $0xe4] sm:$0xf]
    %v116 = vld [vmem:[#allocation2 + $0xe8] sm:$0xf]
    %v117 = vld [vmem:[#allocation2 + $0xec] sm:$0xf]
    %v118 = vld [vmem:[#allocation2 + $0xf0] sm:$0xf]
    %v119 = vld [vmem:[#allocation2 + $0xf4] sm:$0xf]
    %v120 = vld [vmem:[#allocation2 + $0xf8] sm:$0xf]
    %v121 = vld [vmem:[#allocation2 + $0xfc] sm:$0xf]
    %v122 = vld [vmem:[#allocation2 + $0x100] sm:$0xf]
    %v123 = vld [vmem:[#allocation2 + $0x104] sm:$0xf]
    %v124 = vld [vmem:[#allocation2 + $0x108] sm:$0xf]
    %v125 = vld [vmem:[#allocation2 + $0x10c] sm:$0xf]
    %v126 = vld [vmem:[#allocation2 + $0x110] sm:$0xf]
    %v127 = vld [vmem:[#allocation2 + $0x114] sm:$0xf]
    %v128 = vld [vmem:[#allocation2 + $0x118] sm:$0xf]
    %v129 = vld [vmem:[#allocation2 + $0x11c] sm:$0xf]
    %v130 = vld [vmem:[#allocation2 + $0x120] sm:$0xf]
    %v131 = vld [vmem:[#allocation2 + $0x124] sm:$0xf]
    %v132 = vld [vmem:[#allocation2 + $0x128] sm:$0xf]
    %v133 = vld [vmem:[#allocation2 + $0x12c] sm:$0xf]
    %v134 = vld [vmem:[#allocation2 + $0x130] sm:$0xf]
    %v135 = vld [vmem:[#allocation2 + $0x134] sm:$0xf]
    %v136 = vld [vmem:[#allocation2 + $0x138] sm:$0xf]
    %v137 = vld [vmem:[#allocation2 + $0x13c] sm:$0xf]
    %v138 = vld [vmem:[#allocation2 + $0x140] sm:$0xf]
    %v139 = vld [vmem:[#allocation2 + $0x144] sm:$0xf]
    %v140 = vld [vmem:[#allocation2 + $0x148] sm:$0xf]
    %v141 = vld [vmem:[#allocation2 + $0x14c] sm:$0xf]
    %v142 = vld [vmem:[#allocation2 + $0x150] sm:$0xf]
    %v143 = vld [vmem:[#allocation2 + $0x154] sm:$0xf]
    %v144 = vld [vmem:[#allocation2 + $0x158] sm:$0xf]
    %v145 = vld [vmem:[#allocation2 + $0x15c] sm:$0xf]
    %v146 = vld [vmem:[#allocation2 + $0x160] sm:$0xf]
    %v147 = vld [vmem:[#allocation2 + $0x164] sm:$0xf]
    %v148 = vld [vmem:[#allocation2 + $0x168] sm:$0xf]
    %v149 = vld [vmem:[#allocation2 + $0x16c] sm:$0xf]
    %v150 = vld [vmem:[#allocation2 + $0x170] sm:$0xf]
    %v151 = vld [vmem:[#allocation2 + $0x174] sm:$0xf]
    %v152 = vld [vmem:[#allocation2 + $0x178] sm:$0xf]
    %v153 = vld [vmem:[#allocation2 + $0x17c] sm:$0xf]
    %v154 = vld [vmem:[#allocation2 + $0x180] sm:$0xf]
    %v155 = vld [vmem:[#allocation2 + $0x184] sm:$0xf]
    %v156 = vld [vmem:[%s2] sm:$0x1]
    %v158 = vperm.slane %v156, 0
    %v258 = vunpack.c.l.b16 %v58
    %v259 = vunpack.c.l.b16 %v59
    %v260 = vunpack.c.l.b16 %v60
    %v261 = vunpack.c.l.b16 %v61
    %v262 = vunpack.c.l.b16 %v62
    %v263 = vunpack.c.l.b16 %v63
    %v264 = vunpack.c.l.b16 %v64
    %v265 = vunpack.c.l.b16 %v65
    %v266 = vunpack.c.l.b16 %v66
    %v267 = vunpack.c.l.b16 %v67
    %v268 = vunpack.c.l.b16 %v68
    %v269 = vunpack.c.l.b16 %v69
    %v270 = vunpack.c.l.b16 %v70
    %v271 = vunpack.c.l.b16 %v71
    %v272 = vunpack.c.l.b16 %v72
    %v273 = vunpack.c.l.b16 %v73
    %v274 = vunpack.c.l.b16 %v74
    %v275 = vunpack.c.l.b16 %v75
    %v276 = vunpack.c.l.b16 %v76
    %v277 = vunpack.c.l.b16 %v77
    %v278 = vunpack.c.l.b16 %v78
    %v279 = vunpack.c.l.b16 %v79
    %v280 = vunpack.c.l.b16 %v80
    %v281 = vunpack.c.l.b16 %v81
    %v282 = vunpack.c.l.b16 %v82
    %v283 = vunpack.c.l.b16 %v83
    %v284 = vunpack.c.l.b16 %v84
    %v285 = vunpack.c.l.b16 %v85
    %v286 = vunpack.c.l.b16 %v86
    %v287 = vunpack.c.l.b16 %v87
    %v288 = vunpack.c.l.b16 %v88
    %v289 = vunpack.c.l.b16 %v89
    %v290 = vunpack.c.l.b16 %v90
    %v291 = vunpack.c.l.b16 %v91
    %v292 = vunpack.c.l.b16 %v92
    %v293 = vunpack.c.l.b16 %v93
    %v294 = vunpack.c.l.b16 %v94
    %v295 = vunpack.c.l.b16 %v95
    %v296 = vunpack.c.l.b16 %v96
    %v297 = vunpack.c.l.b16 %v97
    %v298 = vunpack.c.l.b16 %v98
    %v299 = vunpack.c.l.b16 %v99
    %v300 = vunpack.c.l.b16 %v100
    %v301 = vunpack.c.l.b16 %v101
    %v302 = vunpack.c.l.b16 %v102
    %v303 = vunpack.c.l.b16 %v103
    %v304 = vunpack.c.l.b16 %v104
    %v305 = vunpack.c.l.b16 %v105
    %v306 = vunpack.c.l.b16 %v106
    %v307 = vunpack.c.l.b16 %v107
    %v308 = vunpack.c.l.b16 %v108
    %v309 = vunpack.c.l.b16 %v109
    %v310 = vunpack.c.l.b16 %v110
    %v311 = vunpack.c.l.b16 %v111
    %v312 = vunpack.c.l.b16 %v112
    %v313 = vunpack.c.l.b16 %v113
    %v314 = vunpack.c.l.b16 %v114
    %v315 = vunpack.c.l.b16 %v115
    %v316 = vunpack.c.l.b16 %v116
    %v317 = vunpack.c.l.b16 %v117
    %v318 = vunpack.c.l.b16 %v118
    %v319 = vunpack.c.l.b16 %v119
    %v320 = vunpack.c.l.b16 %v120
    %v321 = vunpack.c.l.b16 %v121
    %v322 = vunpack.c.l.b16 %v122
    %v323 = vunpack.c.l.b16 %v123
    %v324 = vunpack.c.l.b16 %v124
    %v325 = vunpack.c.l.b16 %v125
    %v326 = vunpack.c.l.b16 %v126
    %v327 = vunpack.c.l.b16 %v127
    %v328 = vunpack.c.l.b16 %v128
    %v329 = vunpack.c.l.b16 %v129
    %v330 = vunpack.c.l.b16 %v130
    %v331 = vunpack.c.l.b16 %v131
    %v332 = vunpack.c.l.b16 %v132
    %v333 = vunpack.c.l.b16 %v133
    %v334 = vunpack.c.l.b16 %v134
    %v335 = vunpack.c.l.b16 %v135
    %v336 = vunpack.c.l.b16 %v136
    %v337 = vunpack.c.l.b16 %v137
    %v338 = vunpack.c.l.b16 %v138
    %v339 = vunpack.c.l.b16 %v139
    %v340 = vunpack.c.l.b16 %v140
    %v341 = vunpack.c.l.b16 %v141
    %v342 = vunpack.c.l.b16 %v142
    %v343 = vunpack.c.l.b16 %v143
    %v344 = vunpack.c.l.b16 %v144
    %v345 = vunpack.c.l.b16 %v145
    %v346 = vunpack.c.l.b16 %v146
    %v347 = vunpack.c.l.b16 %v147
    %v348 = vunpack.c.l.b16 %v148
    %v349 = vunpack.c.l.b16 %v149
    %v350 = vunpack.c.l.b16 %v150
    %v351 = vunpack.c.l.b16 %v151
    %v352 = vunpack.c.l.b16 %v152
    %v353 = vunpack.c.l.b16 %v153
    %v354 = vunpack.c.l.b16 %v154
    %v355 = vunpack.c.l.b16 %v155
    %v356 = vpack.c.b16 %v259, %v258
    %v357 = vpack.c.b16 %v261, %v260
    %v358 = vpack.c.b16 %v263, %v262
    %v359 = vpack.c.b16 %v265, %v264
    %v360 = vpack.c.b16 %v267, %v266
    %v361 = vpack.c.b16 %v269, %v268
    %v362 = vpack.c.b16 %v271, %v270
    %v363 = vpack.c.b16 %v273, %v272
    %v364 = vpack.c.b16 %v275, %v274
    %v365 = vpack.c.b16 %v277, %v276
    %v366 = vpack.c.b16 %v279, %v278
    %v367 = vpack.c.b16 %v281, %v280
    %v368 = vpack.c.b16 %v283, %v282
    %v369 = vpack.c.b16 %v285, %v284
    %v370 = vpack.c.b16 %v287, %v286
    %v371 = vpack.c.b16 %v289, %v288
    %v372 = vpack.c.b16 %v291, %v290
    %v373 = vpack.c.b16 %v293, %v292
    %v374 = vpack.c.b16 %v295, %v294
    %v375 = vpack.c.b16 %v297, %v296
    %v376 = vpack.c.b16 %v299, %v298
    %v377 = vpack.c.b16 %v301, %v300
    %v378 = vpack.c.b16 %v303, %v302
    %v379 = vpack.c.b16 %v305, %v304
    %v380 = vpack.c.b16 %v307, %v306
    %v381 = vpack.c.b16 %v309, %v308
    %v382 = vpack.c.b16 %v311, %v310
    %v383 = vpack.c.b16 %v313, %v312
    %v384 = vpack.c.b16 %v315, %v314
    %v385 = vpack.c.b16 %v317, %v316
    %v386 = vpack.c.b16 %v319, %v318
    %v387 = vpack.c.b16 %v321, %v320
    %v388 = vpack.c.b16 %v323, %v322
    %v389 = vpack.c.b16 %v325, %v324
    %v390 = vpack.c.b16 %v327, %v326
    %v391 = vpack.c.b16 %v329, %v328
    %v392 = vpack.c.b16 %v331, %v330
    %v393 = vpack.c.b16 %v333, %v332
    %v394 = vpack.c.b16 %v335, %v334
    %v395 = vpack.c.b16 %v337, %v336
    %v396 = vpack.c.b16 %v339, %v338
    %v397 = vpack.c.b16 %v341, %v340
    %v398 = vpack.c.b16 %v343, %v342
    %v399 = vpack.c.b16 %v345, %v344
    %v400 = vpack.c.b16 %v347, %v346
    %v401 = vpack.c.b16 %v349, %v348
    %v402 = vpack.c.b16 %v351, %v350
    %v403 = vpack.c.b16 %v353, %v352
    %v404 = vpack.c.b16 %v355, %v354
    %vm454 = vcmask 130048
    %v456 = vsel %vm454, %v57, 0
    %458 = vmatpush.bf16.msra.mxu0 %v363
    %459 = vmatpush.bf16.msra.mxu0 %v362
    %460 = vmatpush.bf16.msra.mxu0 %v361
    %461 = vmatpush.bf16.msra.mxu0 %v360
    %462 = vmatpush.bf16.msra.mxu0 %v359
    %463 = vmatpush.bf16.msra.mxu0 %v358
    %464 = vmatpush.bf16.msra.mxu0 %v357
    %465 = vmatpush.bf16.msra.mxu0 %v356
    %466 = vmatmul.bf16.gmra.mxu0 %v51
    %v467 = vpop.f32.mrf.mxu0
    %v468 = vadd.f32 %v158, %v467
    %v469 = vpop.f32.mrf.mxu0
    %v470 = vadd.f32 %v158, %v469
    %471 = vdwg.mxu0
    %472 = vmatpush.bf16.msra.mxu0 %v371
    %473 = vmatpush.bf16.msra.mxu0 %v370
    %474 = vmatpush.bf16.msra.mxu0 %v369
    %475 = vmatpush.bf16.msra.mxu0 %v368
    %476 = vmatpush.bf16.msra.mxu0 %v367
    %477 = vmatpush.bf16.msra.mxu0 %v366
    %478 = vmatpush.bf16.msra.mxu0 %v365
    %479 = vmatpush.bf16.msra.mxu0 %v364
    %480 = vmatmul.bf16.gmra.mxu0 %v52
    %v481 = vpop.f32.mrf.mxu0
    %v482 = vadd.f32 %v468, %v481
    %v483 = vpop.f32.mrf.mxu0
    %v484 = vadd.f32 %v470, %v483
    %485 = vdwg.mxu0
    %486 = vmatpush.bf16.msra.mxu0 %v379
    %487 = vmatpush.bf16.msra.mxu0 %v378
    %488 = vmatpush.bf16.msra.mxu0 %v377
    %489 = vmatpush.bf16.msra.mxu0 %v376
    %490 = vmatpush.bf16.msra.mxu0 %v375
    %491 = vmatpush.bf16.msra.mxu0 %v374
    %492 = vmatpush.bf16.msra.mxu0 %v373
    %493 = vmatpush.bf16.msra.mxu0 %v372
    %494 = vmatmul.bf16.gmra.mxu0 %v53
    %v495 = vpop.f32.mrf.mxu0
    %v496 = vadd.f32 %v482, %v495
    %v497 = vpop.f32.mrf.mxu0
    %v498 = vadd.f32 %v484, %v497
    %499 = vdwg.mxu0
    %500 = vmatpush.bf16.msra.mxu0 %v387
    %501 = vmatpush.bf16.msra.mxu0 %v386
    %502 = vmatpush.bf16.msra.mxu0 %v385
    %503 = vmatpush.bf16.msra.mxu0 %v384
    %504 = vmatpush.bf16.msra.mxu0 %v383
    %505 = vmatpush.bf16.msra.mxu0 %v382
    %506 = vmatpush.bf16.msra.mxu0 %v381
    %507 = vmatpush.bf16.msra.mxu0 %v380
    %508 = vmatmul.bf16.gmra.mxu0 %v54
    %v509 = vpop.f32.mrf.mxu0
    %v510 = vadd.f32 %v496, %v509
    %v511 = vpop.f32.mrf.mxu0
    %v512 = vadd.f32 %v498, %v511
    %513 = vdwg.mxu0
    %514 = vmatpush.bf16.msra.mxu0 %v395
    %515 = vmatpush.bf16.msra.mxu0 %v394
    %516 = vmatpush.bf16.msra.mxu0 %v393
    %517 = vmatpush.bf16.msra.mxu0 %v392
    %518 = vmatpush.bf16.msra.mxu0 %v391
    %519 = vmatpush.bf16.msra.mxu0 %v390
    %520 = vmatpush.bf16.msra.mxu0 %v389
    %521 = vmatpush.bf16.msra.mxu0 %v388
    %522 = vmatmul.bf16.gmra.mxu0 %v55
    %v523 = vpop.f32.mrf.mxu0
    %v524 = vadd.f32 %v510, %v523
    %v525 = vpop.f32.mrf.mxu0
    %v526 = vadd.f32 %v512, %v525
    %527 = vdwg.mxu0
    %528 = vmatpush.bf16.msra.mxu0 %v403
    %529 = vmatpush.bf16.msra.mxu0 %v402
    %530 = vmatpush.bf16.msra.mxu0 %v401
    %531 = vmatpush.bf16.msra.mxu0 %v400
    %532 = vmatpush.bf16.msra.mxu0 %v399
    %533 = vmatpush.bf16.msra.mxu0 %v398
    %534 = vmatpush.bf16.msra.mxu0 %v397
    %535 = vmatpush.bf16.msra.mxu0 %v396
    %536 = vmatmul.bf16.gmra.mxu0 %v56
    %v537 = vpop.f32.mrf.mxu0
    %v538 = vadd.f32 %v524, %v537
    %v539 = vpop.f32.mrf.mxu0
    %v540 = vadd.f32 %v526, %v539
    %541 = vdwg.mxu0
    %542 = vmatpush.bf16.msra.mxu0 0
    %543 = vmatpush.bf16.msra.mxu0 0
    %544 = vmatpush.bf16.msra.mxu0 0
    %545 = vmatpush.bf16.msra.mxu0 0
    %546 = vmatpush.bf16.msra.mxu0 0
    %547 = vmatpush.bf16.msra.mxu0 0
    %548 = vmatpush.bf16.msra.mxu0 0
    %549 = vmatpush.bf16.msra.mxu0 %v404
    %550 = vmatmul.bf16.gmra.mxu0 %v456
    %v551 = vpop.f32.mrf.mxu0
    %v552 = vadd.f32 %v538, %v551
    %v553 = vpop.f32.mrf.mxu0
    %v554 = vadd.f32 %v540, %v553
    %555 = vdwg.mxu0
    %v556 = vmax.f32 %v552, 0.0
    %v557 = vmax.f32 %v554, 0.0
    %v558 = vpack.c.bf16 %v557, %v556
    %v559 = vld [vmem:[%s3] sm:$0xf]
    %v560 = vld [vmem:[%s3 + $0x4] sm:$0xf]
    %v561 = vld [vmem:[%s3 + $0x8] sm:$0xf]
    %v562 = vld [vmem:[%s3 + $0xc] sm:$0xf]
    %v563 = vld [vmem:[%s3 + $0x10] sm:$0xf]
    %v564 = vld [vmem:[%s3 + $0x14] sm:$0xf]
    %v565 = vld [vmem:[%s3 + $0x18] sm:$0xf]
    %v566 = vld [vmem:[%s3 + $0x1c] sm:$0xf]
    %v567 = vld [vmem:[%s3 + $0x20] sm:$0xf]
    %v568 = vld [vmem:[%s3 + $0x24] sm:$0xf]
    %v569 = vld [vmem:[%s3 + $0x28] sm:$0xf]
    %v570 = vld [vmem:[%s3 + $0x2c] sm:$0xf]
    %v571 = vld [vmem:[%s3 + $0x30] sm:$0xf]
    %v572 = vld [vmem:[%s3 + $0x34] sm:$0xf]
    %v573 = vld [vmem:[%s3 + $0x38] sm:$0xf]
    %v574 = vld [vmem:[%s3 + $0x3c] sm:$0xf]
    %v575 = vld [vmem:[%s4] sm:$0x1]
    %v577 = vperm.slane %v575, 0
    %v595 = vunpack.c.l.b16 %v559
    %v596 = vunpack.c.l.b16 %v560
    %v597 = vunpack.c.l.b16 %v561
    %v598 = vunpack.c.l.b16 %v562
    %v599 = vunpack.c.l.b16 %v563
    %v600 = vunpack.c.l.b16 %v564
    %v601 = vunpack.c.l.b16 %v565
    %v602 = vunpack.c.l.b16 %v566
    %v603 = vunpack.c.l.b16 %v567
    %v604 = vunpack.c.l.b16 %v568
    %v605 = vunpack.c.l.b16 %v569
    %v606 = vunpack.c.l.b16 %v570
    %v607 = vunpack.c.l.b16 %v571
    %v608 = vunpack.c.l.b16 %v572
    %v609 = vunpack.c.l.b16 %v573
    %v610 = vunpack.c.l.b16 %v574
    %v611 = vpack.c.b16 %v596, %v595
    %v612 = vpack.c.b16 %v598, %v597
    %v613 = vpack.c.b16 %v600, %v599
    %v614 = vpack.c.b16 %v602, %v601
    %v615 = vpack.c.b16 %v604, %v603
    %v616 = vpack.c.b16 %v606, %v605
    %v617 = vpack.c.b16 %v608, %v607
    %v618 = vpack.c.b16 %v610, %v609
    %627 = vmatpush.bf16.msra.mxu0 %v618
    %628 = vmatpush.bf16.msra.mxu0 %v617
    %629 = vmatpush.bf16.msra.mxu0 %v616
    %630 = vmatpush.bf16.msra.mxu0 %v615
    %631 = vmatpush.bf16.msra.mxu0 %v614
    %632 = vmatpush.bf16.msra.mxu0 %v613
    %633 = vmatpush.bf16.msra.mxu0 %v612
    %634 = vmatpush.bf16.msra.mxu0 %v611
    %635 = vmatmul.bf16.gmra.mxu0 %v558
    %v636 = vpop.f32.mrf.mxu0
    %v637 = vadd.f32 %v577, %v636
    %v638 = vpop.f32.mrf.mxu0
    %v639 = vadd.f32 %v577, %v638
    %640 = vdwg.mxu0
    %v641 = vlaneseq
    %v642 = vand.u32 %v641, 127
    %vm643 = vcmp.lt.s32.totalorder %v642, 10
    %v644 = vsel %vm643, %v637, -inf
    %v645 = vsel %vm643, %v639, -inf
    %646 = vmax.xlane.f32.xlu0 %v644
    %v647 = vpop.xlane.xlu0 %646
    %648 = vmax.xlane.f32.xlu0 %v645
    %v649 = vpop.xlane.xlu0 %648
    %v650 = vsub.f32 %v644, %v647
    %v651 = vsub.f32 %v645, %v649
    %v652 = vmul.f32 %v650, 1.442695
    %v653 = vpow.pop %v652
    %v654 = vmul.f32 %v651, 1.442695
    %v655 = vpow.pop %v654
    %656 = vadd.xlane.f32.xlu0 %v653
    %v657 = vpop.xlane.xlu0 %656
    %658 = vadd.xlane.f32.xlu0 %v655
    %v659 = vpop.xlane.xlu0 %658
    %v660 = vlog2.pop %v657
    %v661 = vmul.f32 %v660, 0.6931472
    %v662 = vlog2.pop %v659
    %v663 = vmul.f32 %v662, 0.6931472
    %v664 = vsub.f32 %v650, %v661
    %v665 = vsub.f32 %v651, %v663
    %666 = vst [vmem:[%s5] sm:$0xff] %v664
    %667 = vst [vmem:[%s5 + $0x8] sm:$0xff] %v665
    // Predicated region
    $region26: #{mnist_classifier_forward.1} parent=1 // pred_check
      _
    $region27: #{mnist_classifier_forward.1} parent=1 // pred_check_branch
      %669 = sbr.rel (0) target = $region29
    $region28: #{mnist_classifier_forward.1} parent=1 // pred_region
      _
    $region29: #{mnist_classifier_forward.1} parent=1 // pred_fallthru
      _
    // Predicated region
    $region30: #{mnist_classifier_forward.1} parent=1 // pred_check
      _
    $region31: #{mnist_classifier_forward.1} parent=1 // pred_check_branch
      %671 = sbr.rel (0) target = $region33
    $region32: #{mnist_classifier_forward.1} parent=1 // pred_region
      _
    $region33: #{mnist_classifier_forward.1} parent=1 // pred_fallthru
      _
    %672 = vsyncpa [#allocation3], 1

</llo_original>
